<compile_context>
chip_gen: v5e
topology: v5e:2x2
jax: 0.10.0
libtpu: 0.0.40
codegen_flags: <defaults>
</compile_context>

<pallas_src>
import functools

import jax
import jax.numpy as jnp
import numpy as np
from jax.experimental import pallas as pl
from jax.experimental.pallas import tpu as pltpu

HID = 10    # hidden channels in the converter
HP = 16     # hidden channels padded to a sublane-aligned row count
KSZ = 3     # conv kernel size


def _round_up(x, m):
    return ((x + m - 1) // m) * m


def _shl(v, t):
    """Circular lane shift-left by t: out[:, i] = v[:, i + t].
    Wrapped / cross-row lanes are only ever read at positions the masks drop."""
    length = v.shape[-1]
    t = t % length
    if t == 0:
        return v
    return pltpu.roll(v, length - t, axis=1)


def _shr(v, t):
    """Circular lane shift-right by t: out[:, i] = v[:, i - t]."""
    length = v.shape[-1]
    t = t % length
    if t == 0:
        return v
    return pltpu.roll(v, t, axis=1)


def _dlem_kernel(data_ref, par_ref, out_ref, *, n, diag_len, index_diag, transform):
    f32 = jnp.float32
    cp = data_ref.shape[0] - 1           # padded channel row count
    kin = KSZ * cp
    bc = par_ref.shape[1] - 2            # bias column index

    # ---- parameter pack (constant index_map -> fetched once, reused per tile)
    w1f = par_ref[0 * HP:1 * HP, 0:kin]             # (16, 3*CP) fused k=3 input conv
    b1 = par_ref[0 * HP:1 * HP, bc:bc + 1]          # (16, 1)
    const = par_ref[0:1, bc + 1:bc + 2]             # (1, 1)
    w2 = par_ref[1 * HP:2 * HP, 0:HP]               # (16, 16)
    b2 = par_ref[1 * HP:2 * HP, bc:bc + 1]
    wtf = par_ref[2 * HP:3 * HP, 0:3 * HP]          # (16, 48) fused k=3 transposed conv
    bt = par_ref[2 * HP:3 * HP, bc:bc + 1]
    w4 = par_ref[3 * HP:3 * HP + 8, 0:HP]           # (8, 16)  rows 2..7 are zero pad
    b4 = par_ref[3 * HP:3 * HP + 8, bc:bc + 1]

    # ---- data pack: padded signal channels + padded curr_diag row
    x = data_ref[0:cp, :]                           # (CP, T)
    curr = data_ref[cp:cp + 1, :]                   # (1, T)
    t_lanes = x.shape[1]

    # ---- in-kernel masks (tile always starts on a batch-row boundary)
    pos = jax.lax.broadcasted_iota(jnp.int32, (1, t_lanes), 1) % n
    m_cv = (pos < (n - 2)).astype(f32)              # valid "valid-conv" lanes
    valid = pos < (diag_len - 1)                    # valid output lanes

    # --- Conv1d(C -> 10, k=3, valid) + ReLU: fused-K matmul on rolled taps.
    #     Cross-row / wrap reads only affect positions >= n-2, zeroed by m_cv.
    xs = jnp.concatenate([x, _shl(x, 1), _shl(x, 2)], axis=0)     # (3*CP, T), 8-aligned
    h1 = jnp.maximum(jnp.dot(w1f, xs, preferred_element_type=f32) + b1, 0.0)

    # --- Conv1d(10 -> 10, k=1) + ReLU; zero the 2 invalid tail lanes of each
    #     batch row (also kills cross-row/wrap leakage for the later shifts).
    h2 = jnp.maximum(jnp.dot(w2, h1, preferred_element_type=f32) + b2, 0.0)
    h2 = h2 * m_cv

    # --- ConvTranspose1d(10 -> 10, k=3) + ReLU as ONE fused-K matmul:
    #     h3[:, p] = sum_t wt_t^T @ h2[:, p - t]; rolled copies stack at 16-row
    #     offsets, so every concat piece is sublane aligned and the MXU emits
    #     16 output rows instead of 30.
    h2s = jnp.concatenate([h2, _shr(h2, 1), _shr(h2, 2)], axis=0)  # (48, T)
    h3 = jnp.maximum(jnp.dot(wtf, h2s, preferred_element_type=f32) + bt, 0.0)

    # --- Conv1d(10 -> 2, k=1) + Sigmoid (explicit form; exp runs on the EUP).
    z = jnp.dot(w4, h3, preferred_element_type=f32) + b4           # (8, T)
    lr = 1.0 / (1.0 + jnp.exp(-z))
    left = lr[0:1, :]
    right = lr[1:2, :]

    # --- diagonal mass propagation, vectorized over batch on the lane axis ---
    mass_in = _shl(curr * right, 1) + curr * _shl(left, index_diag)
    mass_out = right + _shl(left, index_diag + 1)
    mass_out = jnp.where(valid, mass_out, 1.0)       # keep the reciprocal finite
    inv = pl.reciprocal(mass_out, approx=True)       # EUP slot
    inv = inv * (2.0 - mass_out * inv)               # one Newton step
    pred = (const * mass_in) * inv
    pred = jnp.where(valid, pred, 1.0)               # keep the log finite

    res = jnp.log(pred) if transform else pred
    out_ref[...] = jnp.where(valid, res, 0.0)        # single lane-dense store


def _pack_inputs(signal_bnc, curr_diag):
    """(B, N, C) signal + (B, dl) curr  ->  (CP + 1, B*N) f32 data pack."""
    B, N, C = signal_bnc.shape
    dl = curr_diag.shape[1]
    CP = _round_up(C, 8)
    BN = B * N
    x = jnp.transpose(signal_bnc, (0, 2, 1)).astype(jnp.float32)           # (B, C, N)
    xp = jnp.zeros((B, CP, N), jnp.float32).at[:, :C, :].set(x)
    xp = jnp.transpose(xp, (1, 0, 2)).reshape(CP, BN)                      # (CP, B*N)
    currN = jnp.zeros((B, N), jnp.float32).at[:, :dl].set(
        curr_diag.astype(jnp.float32)).reshape(1, BN)
    return jnp.concatenate([xp, currN], axis=0)                           # (CP+1, B*N)


def _pack_params(params, c_in):
    """Pack weights/biases/const into one sublane-aligned (3*HP+8, BC+2) array."""
    w1, b1, w2, b2, wt, bt, w4, b4, const = params
    CP = _round_up(c_in, 8)
    KIN = KSZ * CP
    BC = max(KIN, KSZ * HP, HP)
    P = jnp.zeros((3 * HP + 8, BC + 2), jnp.float32)
    for t in range(KSZ):                                  # fused k=3 input conv taps
        P = P.at[0:HID, t * CP:t * CP + c_in].set(w1[:, :, t].astype(jnp.float32))
    P = P.at[0:HID, BC].set(b1.astype(jnp.float32))
    P = P.at[0, BC + 1].set(jnp.asarray(const, jnp.float32))
    P = P.at[HP:HP + HID, 0:HID].set(w2[:, :, 0].astype(jnp.float32))
    P = P.at[HP:HP + HID, BC].set(b2.astype(jnp.float32))
    for t in range(KSZ):                                  # fused k=3 transposed conv taps
        P = P.at[2 * HP:2 * HP + HID, t * HP:t * HP + HID].set(
            wt[:, :, t].T.astype(jnp.float32))
    P = P.at[2 * HP:2 * HP + HID, BC].set(bt.astype(jnp.float32))
    P = P.at[3 * HP:3 * HP + 2, 0:HID].set(w4[:, :, 0].astype(jnp.float32))
    P = P.at[3 * HP:3 * HP + 2, BC].set(b4.astype(jnp.float32))
    return P


def _pick_tile_bn(B, N, target_lanes):
    """Largest lane tile that is a whole number of batch rows, divides B*N and
    is a multiple of 128 (or the full B*N)."""
    BN = B * N
    if BN <= target_lanes:
        return BN
    best = BN                    # fallback: single tile (always legal)
    for bt in range(1, B + 1):
        if B % bt:
            continue
        t = bt * N
        if t <= target_lanes and t % 128 == 0:
            best = t
    # TODO(synk): pad the batch (with a real-row mask) when B has no divisor
    # that yields a 128-multiple tile <= target_lanes.
    return best


def dlem_forward(signal_bnc, curr_diag, params, index_diag, transform=True,
                 tile_lanes=4096):
    """signal_bnc: (B, n, dim_num) (PyTorch forward layout); curr_diag: (B, n - index_diag)."""
    B, N, C = signal_bnc.shape
    dl = curr_diag.shape[1]
    BN = B * N

    data = _pack_inputs(signal_bnc, curr_diag)
    pars = _pack_params(params, C)
    TILE = _pick_tile_bn(B, N, tile_lanes)

    kernel = functools.partial(
        _dlem_kernel, n=N, diag_len=dl, index_diag=int(index_diag),
        transform=bool(transform))

    flops = 2 * (KSZ * C * HID + HID * HID + KSZ * HID * HID + 2 * HID) * BN
    cost = pl.CostEstimate(flops=flops, transcendentals=4 * BN,
                           bytes_accessed=int(data.size + pars.size + BN) * 4)

    out_flat = pl.pallas_call(
        kernel,
        out_shape=jax.ShapeDtypeStruct((1, BN), jnp.float32),
        grid=(BN // TILE,),
        in_specs=[
            # TODO(synk): pipeline_mode=pl.Buffered(3) here if the input DMA is
            # exposed on v5e.
            pl.BlockSpec((data.shape[0], TILE), lambda i: (0, i)),
            pl.BlockSpec(pars.shape, lambda i: (0, 0)),
        ],
        out_specs=pl.BlockSpec((1, TILE), lambda i: (0, i)),
        compiler_params=pltpu.CompilerParams(
            dimension_semantics=("parallel",),        # megacore on v7x
            vmem_limit_bytes=32 * 1024 * 1024),
        cost_estimate=cost,
    )(data, pars)

    # de-flatten, drop the invalid tail lanes; two-pass mean for the transform.
    res = out_flat.reshape(B, N)[:, :dl - 1]
    if transform:
        res = res - jnp.mean(res)
    return res


def dlem_forward_ref(signal_bnc, curr_diag, params, index_diag, transform=True):
    """Plain-JAX reference matching PyTorch semantics (HIGHEST matmul precision,
    so the reference is not silently bf16 on TPU)."""
    hi = jax.lax.Precision.HIGHEST
    w1, b1, w2, b2, wt, bt, w4, b4, const = params
    x = jnp.swapaxes(signal_bnc, -1, -2)                 # (B, C, N)
    B, _, N = x.shape
    L1 = N - 2
    h1 = jnp.zeros((B, HID, L1), jnp.float32)
    for t in range(KSZ):
        h1 = h1 + jnp.einsum('oi,bil->bol', w1[:, :, t], x[:, :, t:t + L1],
                             precision=hi)
    h1 = jax.nn.relu(h1 + b1[None, :, None])
    h2 = jax.nn.relu(jnp.einsum('oi,bil->bol', w2[:, :, 0], h1, precision=hi)
                     + b2[None, :, None])
    h3 = jnp.zeros((B, HID, N), jnp.float32)
    for t in range(KSZ):
        h3 = h3.at[:, :, t:t + L1].add(
            jnp.einsum('io,bil->bol', wt[:, :, t], h2, precision=hi))
    h3 = jax.nn.relu(h3 + bt[None, :, None])
    lr = jax.nn.sigmoid(jnp.einsum('oi,bil->bol', w4[:, :, 0], h3, precision=hi)
                        + b4[None, :, None])
    left, right = lr[:, 0, :], lr[:, 1, :]
    mass_in = curr_diag[:, 1:] * right[:, 1:N - index_diag]
    mass_in = mass_in + curr_diag[:, :-1] * left[:, index_diag:N - 1]
    mass_out = right[:, 0:N - index_diag - 1] + left[:, index_diag + 1:N]
    pred = const * mass_in / mass_out
    if transform:
        pred = jnp.log(pred)
        pred = pred - jnp.mean(pred)
    return pred


def _make_params(key, dim_num):
    keys = jax.random.split(key, 8)

    def u(k, shape, fan):
        s = 1.0 / np.sqrt(fan)
        return jax.random.uniform(k, shape, jnp.float32, -s, s)

    # Parameter shapes follow the PyTorch module __init__.
    w1 = u(keys[0], (HID, dim_num, KSZ), dim_num * KSZ)
    b1 = u(keys[1], (HID,), dim_num * KSZ)
    w2 = u(keys[2], (HID, HID, 1), HID)
    b2 = u(keys[3], (HID,), HID)
    wt = u(keys[4], (HID, HID, KSZ), HID * KSZ)   # ConvTranspose1d weight: (in, out, k)
    bt = u(keys[5], (HID,), HID * KSZ)
    w4 = u(keys[6], (2, HID, 1), HID)
    b4 = u(keys[7], (2,), HID)
    const = jnp.float32(0.99)
    return (w1, b1, w2, b2, wt, bt, w4, b4, const)


def _run_case(key, B, n, dim_num, index_diag, tile_lanes):
    kp, ks, kc = jax.random.split(key, 3)
    params = _make_params(kp, dim_num)
    diag_len = n - index_diag
    signal = jax.random.normal(ks, (B, n, dim_num), jnp.float32)
    curr_diag = jax.random.uniform(kc, (B, diag_len), jnp.float32, 0.5, 1.5)
    for transform in (True, False):
        out = dlem_forward(signal, curr_diag, params, index_diag,
                           transform=transform, tile_lanes=tile_lanes)
        out = jax.block_until_ready(out)
        ref = dlem_forward_ref(signal, curr_diag, params, index_diag,
                               transform=transform)
        np.testing.assert_allclose(np.asarray(out), np.asarray(ref),
                                   rtol=5e-4, atol=5e-5)


if __name__ == "__main__":
    key = jax.random.PRNGKey(0)
    k1, k2 = jax.random.split(key)
    # Small shape (single-tile grid).
    _run_case(k1, B=2, n=16, dim_num=4, index_diag=2, tile_lanes=4096)
    # Larger shape forcing a multi-tile "parallel" grid (2 tiles of 8 rows x 128).
    _run_case(k2, B=16, n=128, dim_num=4, index_diag=3, tile_lanes=1024)
    print("KERNEL_OK")
</pallas_src>

<mosaic_0001>
module attributes {stable_mosaic.version = 11 : i64} {
  func.func @_dlem_kernel(%arg0: i32, %arg1: memref<9x32xf32, #tpu.memory_space<vmem>>, %arg2: memref<56x50xf32, #tpu.memory_space<vmem>>, %arg3: memref<1x32xf32, #tpu.memory_space<vmem>>) attributes {dimension_semantics = [#tpu.dimension_semantics<parallel>], iteration_bounds = array<i64: 1>, scalar_prefetch = 0 : i64, scratch_operands = 0 : i64, tpu.core_type = #tpu.core_type<tc>, window_params = [{transform_indices = @transform_0, window_bounds = array<i64: 9, 32>}, {pipeline_mode = #tpu.pipeline_mode<synchronous>, transform_indices = @transform_1, window_bounds = array<i64: 56, 50>}, {transform_indices = @transform_2, window_bounds = array<i64: 1, 32>}]} {
    %c0 = arith.constant 0 : index
    %c0_0 = arith.constant 0 : index
    %0 = vector.load %arg2[%c0, %c0_0] : memref<56x50xf32, #tpu.memory_space<vmem>>, vector<16x24xf32>
    %c0_1 = arith.constant 0 : index
    %c48 = arith.constant 48 : index
    %1 = vector.load %arg2[%c0_1, %c48] : memref<56x50xf32, #tpu.memory_space<vmem>>, vector<16x1xf32>
    %c0_2 = arith.constant 0 : index
    %c49 = arith.constant 49 : index
    %2 = vector.load %arg2[%c0_2, %c49] : memref<56x50xf32, #tpu.memory_space<vmem>>, vector<1x1xf32>
    %c16 = arith.constant 16 : index
    %c0_3 = arith.constant 0 : index
    %3 = vector.load %arg2[%c16, %c0_3] : memref<56x50xf32, #tpu.memory_space<vmem>>, vector<16x16xf32>
    %c16_4 = arith.constant 16 : index
    %c48_5 = arith.constant 48 : index
    %4 = vector.load %arg2[%c16_4, %c48_5] : memref<56x50xf32, #tpu.memory_space<vmem>>, vector<16x1xf32>
    %c32 = arith.constant 32 : index
    %c0_6 = arith.constant 0 : index
    %5 = vector.load %arg2[%c32, %c0_6] : memref<56x50xf32, #tpu.memory_space<vmem>>, vector<16x48xf32>
    %c32_7 = arith.constant 32 : index
    %c48_8 = arith.constant 48 : index
    %6 = vector.load %arg2[%c32_7, %c48_8] : memref<56x50xf32, #tpu.memory_space<vmem>>, vector<16x1xf32>
    %c48_9 = arith.constant 48 : index
    %c0_10 = arith.constant 0 : index
    %7 = vector.load %arg2[%c48_9, %c0_10] : memref<56x50xf32, #tpu.memory_space<vmem>>, vector<8x16xf32>
    %c48_11 = arith.constant 48 : index
    %c48_12 = arith.constant 48 : index
    %8 = vector.load %arg2[%c48_11, %c48_12] : memref<56x50xf32, #tpu.memory_space<vmem>>, vector<8x1xf32>
    %c0_13 = arith.constant 0 : index
    %c0_14 = arith.constant 0 : index
    %9 = vector.load %arg1[%c0_13, %c0_14] : memref<9x32xf32, #tpu.memory_space<vmem>>, vector<8x32xf32>
    %c8 = arith.constant 8 : index
    %c0_15 = arith.constant 0 : index
    %10 = vector.load %arg1[%c8, %c0_15] : memref<9x32xf32, #tpu.memory_space<vmem>>, vector<1x32xf32>
    %11 = tpu.iota {dimensions = array<i32: 1>} : vector<1x32xi32>
    %c16_i32 = arith.constant 16 : i32
    %c0_i32 = arith.constant 0 : i32
    %12 = arith.cmpi eq, %c16_i32, %c0_i32 : i32
    %c1_i32 = arith.constant 1 : i32
    %13 = arith.select %12, %c1_i32, %c16_i32 : i32
    %14 = vector.broadcast %13 : i32 to vector<1x32xi32>
    %15 = arith.remsi %11, %14 : vector<1x32xi32>
    %c0_i32_16 = arith.constant 0 : i32
    %16 = vector.broadcast %c0_i32_16 : i32 to vector<1x32xi32>
    %17 = arith.cmpi ne, %15, %16 : vector<1x32xi32>
    %c0_i32_17 = arith.constant 0 : i32
    %18 = vector.broadcast %c0_i32_17 : i32 to vector<1x32xi32>
    %19 = arith.cmpi slt, %15, %18 : vector<1x32xi32>
    %c0_i32_18 = arith.constant 0 : i32
    %20 = arith.cmpi slt, %13, %c0_i32_18 : i32
    %21 = vector.broadcast %20 : i1 to vector<1x32xi1>
    %22 = vector.broadcast %21 : vector<1x32xi1> to vector<1x32xi1>
    %23 = arith.xori %19, %22 : vector<1x32xi1>
    %24 = arith.andi %23, %17 : vector<1x32xi1>
    %25 = vector.broadcast %13 : i32 to vector<1x32xi32>
    %26 = arith.addi %15, %25 : vector<1x32xi32>
    %27 = arith.select %24, %26, %15 : vector<1x32xi1>, vector<1x32xi32>
    %c14_i32 = arith.constant 14 : i32
    %28 = vector.broadcast %c14_i32 : i32 to vector<1x32xi32>
    %29 = arith.cmpi slt, %27, %28 : vector<1x32xi32>
    %30 = arith.extui %29 : vector<1x32xi1> to vector<1x32xi32>
    %31 = arith.sitofp %30 : vector<1x32xi32> to vector<1x32xf32>
    %c13_i32 = arith.constant 13 : i32
    %32 = vector.broadcast %c13_i32 : i32 to vector<1x32xi32>
    %33 = arith.cmpi slt, %27, %32 : vector<1x32xi32>
    %c31_i32 = arith.constant 31 : i32
    %34 = tpu.dynamic_rotate %9 by %c31_i32 dim 1 : vector<8x32xf32>, i32 -> vector<8x32xf32>
    %c30_i32 = arith.constant 30 : i32
    %35 = tpu.dynamic_rotate %9 by %c30_i32 dim 1 : vector<8x32xf32>, i32 -> vector<8x32xf32>
    %36 = tpu.concatenate %9, %34, %35 in 0 : vector<8x32xf32>, vector<8x32xf32>, vector<8x32xf32> -> vector<24x32xf32>
    %cst = arith.constant dense<0.000000e+00> : vector<16x32xf32>
    %37 = tpu.matmul %0, %36, %cst {dimension_numbers = #tpu.dot_dimension_numbers<[1], [0], [0], [1], [0, 0, 1, 1], [], []>} : vector<16x24xf32>, vector<24x32xf32>, vector<16x32xf32> -> vector<16x32xf32>
    %38 = vector.broadcast %1 : vector<16x1xf32> to vector<16x32xf32>
    %39 = arith.addf %37, %38 : vector<16x32xf32>
    %cst_19 = arith.constant 0.000000e+00 : f32
    %40 = vector.broadcast %cst_19 : f32 to vector<16x32xf32>
    %41 = arith.maximumf %39, %40 : vector<16x32xf32>
    %cst_20 = arith.constant dense<0.000000e+00> : vector<16x32xf32>
    %42 = tpu.matmul %3, %41, %cst_20 {dimension_numbers = #tpu.dot_dimension_numbers<[1], [0], [0], [1], [0, 0, 1, 1], [], []>} : vector<16x16xf32>, vector<16x32xf32>, vector<16x32xf32> -> vector<16x32xf32>
    %43 = vector.broadcast %4 : vector<16x1xf32> to vector<16x32xf32>
    %44 = arith.addf %42, %43 : vector<16x32xf32>
    %cst_21 = arith.constant 0.000000e+00 : f32
    %45 = vector.broadcast %cst_21 : f32 to vector<16x32xf32>
    %46 = arith.maximumf %44, %45 : vector<16x32xf32>
    %47 = vector.broadcast %31 : vector<1x32xf32> to vector<16x32xf32>
    %48 = arith.mulf %46, %47 : vector<16x32xf32>
    %c1_i32_22 = arith.constant 1 : i32
    %49 = tpu.dynamic_rotate %48 by %c1_i32_22 dim 1 : vector<16x32xf32>, i32 -> vector<16x32xf32>
    %c2_i32 = arith.constant 2 : i32
    %50 = tpu.dynamic_rotate %48 by %c2_i32 dim 1 : vector<16x32xf32>, i32 -> vector<16x32xf32>
    %51 = tpu.concatenate %48, %49, %50 in 0 : vector<16x32xf32>, vector<16x32xf32>, vector<16x32xf32> -> vector<48x32xf32>
    %cst_23 = arith.constant dense<0.000000e+00> : vector<16x32xf32>
    %52 = tpu.matmul %5, %51, %cst_23 {dimension_numbers = #tpu.dot_dimension_numbers<[1], [0], [0], [1], [0, 0, 1, 1], [], []>} : vector<16x48xf32>, vector<48x32xf32>, vector<16x32xf32> -> vector<16x32xf32>
    %53 = vector.broadcast %6 : vector<16x1xf32> to vector<16x32xf32>
    %54 = arith.addf %52, %53 : vector<16x32xf32>
    %cst_24 = arith.constant 0.000000e+00 : f32
    %55 = vector.broadcast %cst_24 : f32 to vector<16x32xf32>
    %56 = arith.maximumf %54, %55 : vector<16x32xf32>
    %cst_25 = arith.constant dense<0.000000e+00> : vector<8x32xf32>
    %57 = tpu.matmul %7, %56, %cst_25 {dimension_numbers = #tpu.dot_dimension_numbers<[1], [0], [0], [1], [0, 0, 1, 1], [], []>} : vector<8x16xf32>, vector<16x32xf32>, vector<8x32xf32> -> vector<8x32xf32>
    %58 = vector.broadcast %8 : vector<8x1xf32> to vector<8x32xf32>
    %59 = arith.addf %57, %58 : vector<8x32xf32>
    %cst_26 = arith.constant 0.000000e+00 : f32
    %60 = vector.broadcast %cst_26 : f32 to vector<8x32xf32>
    %61 = arith.subf %60, %59 : vector<8x32xf32>
    %62 = math.exp %61 : vector<8x32xf32>
    %cst_27 = arith.constant 1.000000e+00 : f32
    %63 = vector.broadcast %cst_27 : f32 to vector<8x32xf32>
    %64 = arith.addf %63, %62 : vector<8x32xf32>
    %cst_28 = arith.constant 1.000000e+00 : f32
    %65 = vector.broadcast %cst_28 : f32 to vector<8x32xf32>
    %66 = arith.divf %65, %64 : vector<8x32xf32>
    %67 = vector.extract_strided_slice %66 {offsets = [0, 0], sizes = [1, 32], strides = [1, 1]} : vector<8x32xf32> to vector<1x32xf32>
    %68 = vector.extract_strided_slice %66 {offsets = [1, 0], sizes = [1, 32], strides = [1, 1]} : vector<8x32xf32> to vector<1x32xf32>
    %69 = arith.mulf %10, %68 : vector<1x32xf32>
    %c31_i32_29 = arith.constant 31 : i32
    %70 = tpu.dynamic_rotate %69 by %c31_i32_29 dim 1 : vector<1x32xf32>, i32 -> vector<1x32xf32>
    %c30_i32_30 = arith.constant 30 : i32
    %71 = tpu.dynamic_rotate %67 by %c30_i32_30 dim 1 : vector<1x32xf32>, i32 -> vector<1x32xf32>
    %72 = arith.mulf %10, %71 : vector<1x32xf32>
    %73 = arith.addf %70, %72 : vector<1x32xf32>
    %c29_i32 = arith.constant 29 : i32
    %74 = tpu.dynamic_rotate %67 by %c29_i32 dim 1 : vector<1x32xf32>, i32 -> vector<1x32xf32>
    %75 = arith.addf %68, %74 : vector<1x32xf32>
    %cst_31 = arith.constant 1.000000e+00 : f32
    %76 = vector.broadcast %cst_31 : f32 to vector<1x32xf32>
    %77 = arith.select %33, %75, %76 : vector<1x32xi1>, vector<1x32xf32>
    %78 = tpu.reciprocal %77 {approx = true} : vector<1x32xf32> -> vector<1x32xf32>
    %79 = arith.mulf %77, %78 : vector<1x32xf32>
    %cst_32 = arith.constant 2.000000e+00 : f32
    %80 = vector.broadcast %cst_32 : f32 to vector<1x32xf32>
    %81 = arith.subf %80, %79 : vector<1x32xf32>
    %82 = arith.mulf %78, %81 : vector<1x32xf32>
    %83 = vector.broadcast %2 : vector<1x1xf32> to vector<1x32xf32>
    %84 = arith.mulf %83, %73 : vector<1x32xf32>
    %85 = arith.mulf %84, %82 : vector<1x32xf32>
    %cst_33 = arith.constant 1.000000e+00 : f32
    %86 = vector.broadcast %cst_33 : f32 to vector<1x32xf32>
    %87 = arith.select %33, %85, %86 : vector<1x32xi1>, vector<1x32xf32>
    %88 = math.log %87 : vector<1x32xf32>
    %cst_34 = arith.constant 0.000000e+00 : f32
    %89 = vector.broadcast %cst_34 : f32 to vector<1x32xf32>
    %90 = arith.select %33, %88, %89 : vector<1x32xi1>, vector<1x32xf32>
    %c0_35 = arith.constant 0 : index
    %c0_36 = arith.constant 0 : index
    %91 = vector.load %arg3[%c0_35, %c0_36] : memref<1x32xf32, #tpu.memory_space<vmem>>, vector<1x32xf32>
    tpu.vector_store %arg3[%c0_35, %c0_36], %90 {strides = array<i32>} : memref<1x32xf32, #tpu.memory_space<vmem>>, vector<1x32xf32>,
    return
  }
  func.func @transform_0(%arg0: i32) -> (i32, i32) {
    %c0_i32 = arith.constant 0 : i32
    %c0_i32_0 = arith.constant 0 : i32
    return %c0_i32, %arg0 : i32, i32
  }
  func.func @transform_1(%arg0: i32) -> (i32, i32) {
    %c0_i32 = arith.constant 0 : i32
    %c0_i32_0 = arith.constant 0 : i32
    %c0_i32_1 = arith.constant 0 : i32
    return %c0_i32, %c0_i32_0 : i32, i32
  }
  func.func @transform_2(%arg0: i32) -> (i32, i32) {
    %c0_i32 = arith.constant 0 : i32
    %c0_i32_0 = arith.constant 0 : i32
    return %c0_i32, %arg0 : i32, i32
  }
}

</mosaic_0001>

<llo_original>
// kernel: tpu_custom_call.1
$region0: #{tpu_custom_call.1}
  #allocation0 [shape = 'u32[]', space=smem, size = 0x4, offset = 0x4, fixed_abs, tag = 'smem constant byte address 0x4 - core index']
  #allocation1 [shape = 'u32[72,128]{1,0:T(1,128)}', space=vmem, size = 0x9000, scoped, tag = 'internal scratch']
  %s0 = inlined_call_operand.hbm [shape: f32[9,32], index: 0, kind: input, shape index: {}]
  %s1 = inlined_call_operand.hbm [shape: f32[56,50], index: 1, kind: input, shape index: {}]
  %s2 = inlined_call_operand.hbm [shape: f32[1,32], index: 2, kind: output, shape index: {}]
  %s3 = sld [smem:[#allocation0]]
  $region26: #{tpu_custom_call.1} parent=0
    _
  %s5 = ssub.s32 1, %s3
  %s6 = scalar_select 0, %s5, %s3
  $region1: #{tpu_custom_call.1} parent=0
    #allocation2 [shape = 'u8[8192]{0}', space=vmem, size = 0x2000, scoped, tag = 'input window, operand 0, single buffered']
    #allocation3 [shape = 's32[1]{0}', space=sflag, size = 0x4, scoped, tag = 'scoped memory for tpu_custom_call.1']
    #allocation4 [shape = 's32[1]{0}', space=sflag, size = 0x4, scoped, tag = 'scoped memory for tpu_custom_call.1']
    #allocation5 [shape = 'u8[28672]{0}', space=vmem, size = 0x7000, scoped, tag = 'input window, operand 1, single buffered']
    #allocation6 [shape = 's32[1]{0}', space=sflag, size = 0x4, scoped, tag = 'scoped memory for tpu_custom_call.1']
    #allocation7 [shape = 'u8[512]{0}', space=vmem, size = 0x400, scoped, tag = 'output window, operand 0, single buffered']
    %7 = vsyncpa [#allocation3], 0
    %8 = vsyncpa [#allocation6], 0
    %9 = vsyncpa [#allocation4], 0
    // Predicated region
    $region2: #{tpu_custom_call.1} parent=1 // pred_check
      _
    $region3: #{tpu_custom_call.1} parent=1 // pred_check_branch
      %11 = sbr.rel (0) target = $region5
    $region4: #{tpu_custom_call.1} parent=1 // pred_region
      %13 = vsyncadd [#allocation3], 0
      %s14 = sshll.u32 %s0, 4
      %s15 = int_to_ptr.hbm [resolvable:$true] %s14
      %s16 = sshll.u32 [#allocation2], 4
      %s17 = int_to_ptr.vmem [resolvable:$true] %s16
      %22 = dma.hbm_to_vmem [thread:$0]  %s15, 256, %s17, [#allocation3], 128, 128, 8
    $region5: #{tpu_custom_call.1} parent=1 // pred_fallthru
      _
    // Predicated region
    $region6: #{tpu_custom_call.1} parent=1 // pred_check
      _
    $region7: #{tpu_custom_call.1} parent=1 // pred_check_branch
      %24 = sbr.rel (0) target = $region9
    $region8: #{tpu_custom_call.1} parent=1 // pred_region
      %26 = vsyncadd [#allocation6], 0
      %s27 = sshll.u32 %s1, 4
      %s28 = int_to_ptr.hbm [resolvable:$true] %s27
      %s29 = sshll.u32 [#allocation5], 4
      %s30 = int_to_ptr.vmem [resolvable:$true] %s29
      %35 = dma.hbm_to_vmem [thread:$0]  %s28, 896, %s30, [#allocation6], 128, 128, 8
    $region9: #{tpu_custom_call.1} parent=1 // pred_fallthru
      _
    // Predicated region
    $region10: #{tpu_custom_call.1} parent=1 // pred_check
      _
    $region11: #{tpu_custom_call.1} parent=1 // pred_check_branch
      %37 = sbr.rel (0) target = $region13
    $region12: #{tpu_custom_call.1} parent=1 // pred_region
      %39 = dma.done [#allocation3], 256
    $region13: #{tpu_custom_call.1} parent=1 // pred_fallthru
      _
    // Predicated region
    $region14: #{tpu_custom_call.1} parent=1 // pred_check
      _
    $region15: #{tpu_custom_call.1} parent=1 // pred_check_branch
      %41 = sbr.rel (0) target = $region17
    $region16: #{tpu_custom_call.1} parent=1 // pred_region
      %43 = dma.done [#allocation6], 896
    $region17: #{tpu_custom_call.1} parent=1 // pred_fallthru
      _
    %v44 = vld [vmem:[#allocation5] sm:$0xff]
    %v45 = vld [vmem:[#allocation5 + $0x8] sm:$0xff]
    %v46 = vld [vmem:[#allocation5] sm:$0x1]
    %v47 = vld [vmem:[#allocation5 + $0x10] sm:$0xff]
    %v48 = vld [vmem:[#allocation5 + $0x18] sm:$0xff]
    %v49 = vld [vmem:[#allocation5 + $0x20] sm:$0xff]
    %v50 = vld [vmem:[#allocation5 + $0x28] sm:$0xff]
    %v51 = vld [vmem:[#allocation5 + $0x30] sm:$0xff]
    %v52 = vld [vmem:[#allocation2] sm:$0xff]
    %v53 = vld [vmem:[#allocation2 + $0x8] sm:$0x1]
    %v54 = vlaneseq
    %v55 = vand.u32 %v54, 127
    %vm56 = vcmp.lt.s32.totalorder %v55, 0
    %v57 = vsub.s32 0, %v55
    %v58 = vsel %vm56, %v57, %v55
    %v59 = vshrl.u32 %v58, 4
    %v60 = vand.u32 %v58, 15
    %v61 = vsub.s32 0, %v60
    %v62 = vsel %vm56, %v61, %v60
    %vm63 = vcmp.ne.s32.totalorder %v62, 0
    %vm64 = vcmp.lt.s32.totalorder %v62, 0
    %vm65 = vmand %vm64, %vm63
    %v66 = vadd.s32 %v62, 16
    %v67 = vsel %vm65, %v66, %v62
    %vm68 = vcmp.lt.s32.totalorder %v67, 14
    %v69 = vsel %vm68, 1, 0
    %v70 = vcvt.s32.f32 %v69
    %vm71 = vcmp.lt.s32.totalorder %v67, 13
    %vm72 = vcmask 1047808
    %73 = vrot.lane.b32.xlu0 %v52, 32
    %v74 = vpop.permute.xlu0 %73
    %v75 = vsel %vm72, %v74, %v52
    %76 = vrot.lane.b32.xlu0 %v75, 32
    %v77 = vpop.permute.xlu0 %76
    %v78 = vsel %vm72, %v77, %v52
    %80 = vrot.lane.b32.xlu0 %v78, 127
    %v81 = vpop.permute.xlu0 %80
    %83 = vrot.lane.b32.xlu0 %v78, 126
    %v84 = vpop.permute.xlu0 %83
    %87 = vset.pattern.permute.xlu0 48
    %88 = vperm.xlu0 %87, %v44
    %v89 = vpop.permute.xlu0 %88
    %92 = vset.pattern.permute.xlu0 48
    %93 = vperm.xlu0 %92, %v45
    %v94 = vpop.permute.xlu0 %93
    %vm96 = vcmask 195584
    %v97 = vsel %vm96, %v44, 0
    %v99 = vsel %vm96, %v45, 0
    %101 = vmatpush.msra.mxu0 0.0
    %102 = vmatpush.msra.mxu0 0.0
    %103 = vmatpush.msra.mxu0 0.0
    %104 = vmatpush.msra.mxu0 0.0
    %105 = vmatpush.msra.mxu0 0.0
    %106 = vmatpush.msra.mxu0 0.0
    %107 = vmatpush.msra.mxu0 0.0
    %108 = vmatpush.msra.mxu0 0.0
    %109 = vmatpush.msra.mxu0 0.0
    %110 = vmatpush.msra.mxu0 0.0
    %111 = vmatpush.msra.mxu0 0.0
    %112 = vmatpush.msra.mxu0 0.0
    %113 = vmatpush.msra.mxu0 0.0
    %114 = vmatpush.msra.mxu0 %v84
    %115 = vmatpush.msra.mxu0 %v81
    %116 = vmatpush.msra.mxu0 %v52
    %117 = vmatmul.f32.gmra.mxu0 %v97
    %v118 = vpop.f32.mrf.mxu0
    %v119 = vadd.f32 %v89, %v118
    %120 = vmatmul.f32.gmra.mxu0 %v99
    %v121 = vpop.f32.mrf.mxu0
    %v122 = vadd.f32 %v94, %v121
    %123 = vdwg.mxu0
    %v124 = vmax.f32 %v119, 0.0
    %v125 = vmax.f32 %v122, 0.0
    %127 = vset.pattern.permute.xlu0 48
    %128 = vperm.xlu0 %127, %v47
    %v129 = vpop.permute.xlu0 %128
    %132 = vset.pattern.permute.xlu0 48
    %133 = vperm.xlu0 %132, %v48
    %v134 = vpop.permute.xlu0 %133
    %vm136 = vcmask 130048
    %v137 = vsel %vm136, %v47, 0
    %v139 = vsel %vm136, %v48, 0
    %141 = vmatpush.msra.mxu0 0.0
    %142 = vmatpush.msra.mxu0 0.0
    %143 = vmatpush.msra.mxu0 0.0
    %144 = vmatpush.msra.mxu0 0.0
    %145 = vmatpush.msra.mxu0 0.0
    %146 = vmatpush.msra.mxu0 0.0
    %147 = vmatpush.msra.mxu0 0.0
    %148 = vmatpush.msra.mxu0 0.0
    %149 = vmatpush.msra.mxu0 0.0
    %150 = vmatpush.msra.mxu0 0.0
    %151 = vmatpush.msra.mxu0 0.0
    %152 = vmatpush.msra.mxu0 0.0
    %153 = vmatpush.msra.mxu0 0.0
    %154 = vmatpush.msra.mxu0 0.0
    %155 = vmatpush.msra.mxu0 %v125
    %156 = vmatpush.msra.mxu0 %v124
    %157 = vmatmul.f32.gmra.mxu0 %v137
    %v158 = vpop.f32.mrf.mxu0
    %v159 = vadd.f32 %v129, %v158
    %160 = vmatmul.f32.gmra.mxu0 %v139
    %v161 = vpop.f32.mrf.mxu0
    %v162 = vadd.f32 %v134, %v161
    %163 = vdwg.mxu0
    %v164 = vmax.f32 %v159, 0.0
    %v165 = vmax.f32 %v162, 0.0
    %v166 = vmul.f32 %v164, %v70
    %v167 = vmul.f32 %v165, %v70
    %168 = vrot.lane.b32.xlu0 %v166, 32
    %v169 = vpop.permute.xlu0 %168
    %v170 = vsel %vm72, %v169, %v166
    %171 = vrot.lane.b32.xlu0 %v167, 32
    %v172 = vpop.permute.xlu0 %171
    %v173 = vsel %vm72, %v172, %v167
    %174 = vrot.lane.b32.xlu0 %v170, 32
    %v175 = vpop.permute.xlu0 %174
    %176 = vrot.lane.b32.xlu0 %v173, 32
    %v177 = vpop.permute.xlu0 %176
    %v178 = vsel %vm72, %v175, %v166
    %v179 = vsel %vm72, %v177, %v167
    %182 = vrot.lane.b32.xlu0 %v178, 97
    %v183 = vpop.permute.xlu0 %182
    %184 = vrot.lane.b32.xlu0 %v179, 97
    %v185 = vpop.permute.xlu0 %184
    %188 = vrot.lane.b32.xlu0 %v178, 98
    %v189 = vpop.permute.xlu0 %188
    %190 = vrot.lane.b32.xlu0 %v179, 98
    %v191 = vpop.permute.xlu0 %190
    %195 = vset.pattern.permute.xlu0 48
    %196 = vperm.xlu0 %195, %v49
    %v197 = vpop.permute.xlu0 %196
    %200 = vset.pattern.permute.xlu0 48
    %201 = vperm.xlu0 %200, %v50
    %v202 = vpop.permute.xlu0 %201
    %vm204 = vcmask 392192
    %v205 = vsel %vm204, %v49, 0
    %v207 = vsel %vm204, %v50, 0
    %209 = vmatpush.msra.mxu0 0.0
    %210 = vmatpush.msra.mxu0 0.0
    %211 = vmatpush.msra.mxu0 0.0
    %212 = vmatpush.msra.mxu0 0.0
    %213 = vmatpush.msra.mxu0 0.0
    %214 = vmatpush.msra.mxu0 0.0
    %215 = vmatpush.msra.mxu0 0.0
    %216 = vmatpush.msra.mxu0 0.0
    %217 = vmatpush.msra.mxu0 0.0
    %218 = vmatpush.msra.mxu0 0.0
    %219 = vmatpush.msra.mxu0 %v191
    %220 = vmatpush.msra.mxu0 %v189
    %221 = vmatpush.msra.mxu0 %v185
    %222 = vmatpush.msra.mxu0 %v183
    %223 = vmatpush.msra.mxu0 %v167
    %224 = vmatpush.msra.mxu0 %v166
    %225 = vmatmul.f32.gmra.mxu0 %v205
    %v226 = vpop.f32.mrf.mxu0
    %v227 = vadd.f32 %v197, %v226
    %228 = vmatmul.f32.gmra.mxu0 %v207
    %v229 = vpop.f32.mrf.mxu0
    %v230 = vadd.f32 %v202, %v229
    %231 = vdwg.mxu0
    %v232 = vmax.f32 %v227, 0.0
    %v233 = vmax.f32 %v230, 0.0
    %235 = vset.pattern.permute.xlu0 48
    %236 = vperm.xlu0 %235, %v51
    %v237 = vpop.permute.xlu0 %236
    %v239 = vsel %vm136, %v51, 0
    %241 = vmatpush.msra.mxu0 0.0
    %242 = vmatpush.msra.mxu0 0.0
    %243 = vmatpush.msra.mxu0 0.0
    %244 = vmatpush.msra.mxu0 0.0
    %245 = vmatpush.msra.mxu0 0.0
    %246 = vmatpush.msra.mxu0 0.0
    %247 = vmatpush.msra.mxu0 0.0
    %248 = vmatpush.msra.mxu0 0.0
    %249 = vmatpush.msra.mxu0 0.0
    %250 = vmatpush.msra.mxu0 0.0
    %251 = vmatpush.msra.mxu0 0.0
    %252 = vmatpush.msra.mxu0 0.0
    %253 = vmatpush.msra.mxu0 0.0
    %254 = vmatpush.msra.mxu0 0.0
    %255 = vmatpush.msra.mxu0 %v233
    %256 = vmatpush.msra.mxu0 %v232
    %257 = vmatmul.f32.gmra.mxu0 %v239
    %v258 = vpop.f32.mrf.mxu0
    %v259 = vadd.f32 %v237, %v258
    %260 = vdwg.mxu0
    %v261 = vsub.f32 0.0, %v259
    %v262 = vmul.f32 %v261, 1.442695
    %v263 = vpow.pop %v262
    %v264 = vadd.f32 %v263, 1.0
    %v265 = vrcp.pop %v264
    %v266 = vmul.f32 %v264, %v265
    %v267 = vsub.f32 1.0, %v266
    %v268 = vmul.f32 %v265, %v267
    %v269 = vadd.f32 %v265, %v268
    %vm270 = vweird.f32 %v264
    %vm271 = vweird.f32 %v265
    %vm272 = vmor %vm270, %vm271
    %v273 = vsel %vm272, %v265, %v269
    %v274 = vand.u32 2147483647, %v264
    %vm275 = vcmp.eq.f32.partialorder %v274, 8.507059e+37
    %v276 = vand.u32 %v264, 2147483648
    %v277 = vor.u32 1.1754944e-38, %v276
    %v278 = vsel %vm275, %v277, %v273
    %v279 = vmul.f32 1.0, %v278
    %v281 = vrot.slane %v279, 1
    %v283 = vmul.f32 %v53, %v281
    %284 = vrot.lane.b32.xlu0 %v283, 32
    %v285 = vpop.permute.xlu0 %284
    %v286 = vsel %vm72, %v285, %v283
    %287 = vrot.lane.b32.xlu0 %v286, 32
    %v288 = vpop.permute.xlu0 %287
    %v289 = vsel %vm72, %v288, %v283
    %290 = vrot.lane.b32.xlu0 %v279, 32
    %v291 = vpop.permute.xlu0 %290
    %v292 = vsel %vm72, %v291, %v279
    %293 = vrot.lane.b32.xlu0 %v292, 32
    %v294 = vpop.permute.xlu0 %293
    %v295 = vsel %vm72, %v294, %v279
    %297 = vrot.lane.b32.xlu0 %v295, 126
    %v298 = vpop.permute.xlu0 %297
    %v300 = vmul.f32 %v53, %v298
    %302 = vrot.lane.b32.xlu0 %v300, 1
    %v303 = vpop.permute.xlu0 %302
    %v305 = vadd.f32 %v289, %v303
    %v306 = vrot.slane %v295, 7
    %307 = vrot.lane.b32.xlu0 %v306, 125
    %v308 = vpop.permute.xlu0 %307
    %v310 = vadd.f32 %v279, %v308
    %v311 = vsel %vm71, %v310, 1.0
    %v312 = vrcp.pop %v311
    %v313 = vmul.f32 %v311, %v312
    %v314 = vsub.f32 2.0, %v313
    %v315 = vmul.f32 %v312, %v314
    %317 = vset.pattern.permute.xlu0 49
    %318 = vperm.xlu0 %317, %v46
    %v319 = vpop.permute.xlu0 %318
    %v321 = vmul.f32 %v319, %v305
    %v323 = vrot.slane %v315, 1
    %324 = vrot.lane.b32.xlu0 %v323, 1
    %v325 = vpop.permute.xlu0 %324
    %v327 = vmul.f32 %v321, %v325
    %329 = vrot.lane.b32.xlu0 %v327, 127
    %v330 = vpop.permute.xlu0 %329
    %v332 = vsel %vm71, %v330, 1.0
    %v333 = vlog2.pop %v332
    %v334 = vmul.f32 %v333, 0.6931472
    %v335 = vsel %vm71, %v334, 0.0
    %vm336 = vcmask 253952
    %337 = vst.msk [vmem:[#allocation7] sm:$0x1] %vm336, %v335
    // Predicated region
    $region18: #{tpu_custom_call.1} parent=1 // pred_check
      _
    $region19: #{tpu_custom_call.1} parent=1 // pred_check_branch
      %339 = sbr.rel (0) target = $region21
    $region20: #{tpu_custom_call.1} parent=1 // pred_region
      %341 = vsyncadd [#allocation4], 0
      %s343 = sshll.u32 [#allocation7], 4
      %s344 = int_to_ptr.vmem [resolvable:$true] %s343
      %s345 = sshll.u32 %s2, 4
      %s346 = int_to_ptr.hbm [resolvable:$true] %s345
      %348 = dma.vmem_to_hbm [thread:$0]  %s344, 16, %s346, [#allocation4]
    $region21: #{tpu_custom_call.1} parent=1 // pred_fallthru
      _
    // Predicated region
    $region22: #{tpu_custom_call.1} parent=1 // pred_check
      _
    $region23: #{tpu_custom_call.1} parent=1 // pred_check_branch
      %350 = sbr.rel (0) target = $region25
    $region24: #{tpu_custom_call.1} parent=1 // pred_region
      %352 = dma.done [#allocation4], 16
    $region25: #{tpu_custom_call.1} parent=1 // pred_fallthru
      _
    %353 = vsyncpa [#allocation3], 1
    %354 = vsyncpa [#allocation6], 1
    %355 = vsyncpa [#allocation4], 1

</llo_original>
